<compile_context>
chip_gen: v6e
topology: v6e:2x2x1
jax: 0.10.0
libtpu: 0.0.40
codegen_flags: <defaults>
</compile_context>

<pallas_src>
import functools
import math

import jax
import jax.numpy as jnp
from jax.experimental import pallas as pl
from jax.experimental.pallas import tpu as pltpu


def _group_gru_kernel(hidden_size, input_size, num_groups,
                      x_ref, h_ref, wx_ref, wh_ref, hy_ref):
    # x_ref  : (B, N*I)   h_ref : (B, N*H)
    # wx_ref : (N, I, 3H) wh_ref: (N, H, 3H)
    # hy_ref : (B, N*H)
    H = hidden_size
    I = input_size

    outs = []
    # num_groups is small and static -> fully unrolled; each iteration is two
    # small MXU matmuls plus VPU/EUP gate math on VMEM-resident data.
    for n in range(num_groups):
        x_n = x_ref[:, n * I:(n + 1) * I]          # (B, I)
        h_n = h_ref[:, n * H:(n + 1) * H]          # (B, H)
        wx_n = wx_ref[n]                           # (I, 3H)
        wh_n = wh_ref[n]                           # (H, 3H)

        gx = jnp.dot(x_n, wx_n, preferred_element_type=jnp.float32)  # (B, 3H)
        gh = jnp.dot(h_n, wh_n, preferred_element_type=jnp.float32)  # (B, 3H)

        r = jax.nn.sigmoid(gx[:, 0:H] + gh[:, 0:H])                # reset
        z = jax.nn.sigmoid(gx[:, H:2 * H] + gh[:, H:2 * H])        # update
        ng = jnp.tanh(gx[:, 2 * H:3 * H] + r * gh[:, 2 * H:3 * H]) # new gate

        hy = ng + z * (h_n.astype(jnp.float32) - ng)               # (B, H)
        outs.append(hy)

    # One lane-dense (B, N*H) store instead of N masked 32-lane stores.
    hy_ref[...] = jnp.concatenate(outs, axis=-1).astype(hy_ref.dtype)


def group_gru_cell(x, h, w_x2h, w_h2h, *, matmul_dtype=None):
    """
    x:      (B, N, input_size)
    h:      (B, N, H)
    w_x2h:  (N, input_size, 3H)
    w_h2h:  (N, H, 3H)
    returns hy: (B, N, H)
    """
    B, N, I = x.shape
    H = h.shape[-1]
    assert w_x2h.shape == (N, I, 3 * H)
    assert w_h2h.shape == (N, H, 3 * H)

    out_dtype = h.dtype
    if matmul_dtype is not None:
        # v6e/v7x: feed the MXU bf16 operands; accumulation stays f32 in-kernel.
        x = x.astype(matmul_dtype)
        h = h.astype(matmul_dtype)
        w_x2h = w_x2h.astype(matmul_dtype)
        w_h2h = w_h2h.astype(matmul_dtype)
        out_dtype = matmul_dtype

    # Free contiguous reshapes (no data movement, unlike the old transposes):
    # present activations as lane-dense 2-D slabs.
    x2 = x.reshape(B, N * I)
    h2 = h.reshape(B, N * H)

    kernel = functools.partial(_group_gru_kernel, H, I, N)

    out = pl.pallas_call(
        kernel,
        out_shape=jax.ShapeDtypeStruct((B, N * H), out_dtype),
        grid=(1,),
        in_specs=[
            pl.BlockSpec((B, N * I), lambda i: (0, 0)),         # x slab
            pl.BlockSpec((B, N * H), lambda i: (0, 0)),         # h slab
            pl.BlockSpec((N, I, 3 * H), lambda i: (0, 0, 0)),   # w_x2h
            pl.BlockSpec((N, H, 3 * H), lambda i: (0, 0, 0)),   # w_h2h
        ],
        out_specs=pl.BlockSpec((B, N * H), lambda i: (0, 0)),
        compiler_params=pltpu.CompilerParams(
            dimension_semantics=("arbitrary",)),
    )(x2, h2, w_x2h, w_h2h)

    return out.reshape(B, N, H)


def _reference(x, h, w_x2h, w_h2h):
    """Pure-JAX reference matching the PyTorch GroupGRUCell forward."""
    gate_x = jnp.einsum('bni,nik->bnk', x, w_x2h)
    gate_h = jnp.einsum('bnh,nhk->bnk', h, w_h2h)
    i_r, i_i, i_n = jnp.split(gate_x, 3, axis=-1)
    h_r, h_i, h_n = jnp.split(gate_h, 3, axis=-1)
    resetgate = jax.nn.sigmoid(i_r + h_r)
    inputgate = jax.nn.sigmoid(i_i + h_i)
    newgate = jnp.tanh(i_n + resetgate * h_n)
    hy = newgate + inputgate * (h - newgate)
    return hy


if __name__ == "__main__":
    batch = 2
    num_grus = 4
    input_size = 16
    hidden_size = 32

    key = jax.random.PRNGKey(0)
    kx, kh, kwx, kwh = jax.random.split(key, 4)

    # GroupLinearLayer init (0.01 * randn). The module's reset_parameters()
    # overwrites everything with ones, which makes the numerical check trivial,
    # so we keep the GroupLinearLayer init -- forward semantics are identical.
    w_x2h = 0.01 * jax.random.normal(
        kwx, (num_grus, input_size, 3 * hidden_size), dtype=jnp.float32)
    w_h2h = 0.01 * jax.random.normal(
        kwh, (num_grus, hidden_size, 3 * hidden_size), dtype=jnp.float32)

    x = jax.random.normal(kx, (batch, num_grus, input_size), dtype=jnp.float32)
    h0 = jax.random.normal(kh, (batch, num_grus, hidden_size), dtype=jnp.float32)

    hy_ref = _reference(x, h0, w_x2h, w_h2h)

    # f32 path
    hy = jax.jit(group_gru_cell)(x, h0, w_x2h, w_h2h)
    jax.block_until_ready(hy)
    assert hy.shape == (batch, num_grus, hidden_size)
    assert jnp.allclose(hy, hy_ref, atol=1e-5, rtol=1e-5)

    # bf16 matmul-operand path (v6e/v7x MXU peak); gate math stays f32.
    hy_bf16 = jax.jit(
        functools.partial(group_gru_cell, matmul_dtype=jnp.bfloat16)
    )(x, h0, w_x2h, w_h2h)
    jax.block_until_ready(hy_bf16)
    assert jnp.allclose(hy_bf16.astype(jnp.float32), hy_ref,
                        atol=5e-2, rtol=5e-2)

    print("KERNEL_OK")
</pallas_src>

<mosaic_0001>
module attributes {stable_mosaic.version = 11 : i64} {
  func.func @_group_gru_kernel(%arg0: i32, %arg1: memref<2x64xf32, #tpu.memory_space<vmem>>, %arg2: memref<2x128xf32, #tpu.memory_space<vmem>>, %arg3: memref<4x16x96xf32, #tpu.memory_space<vmem>>, %arg4: memref<4x32x96xf32, #tpu.memory_space<vmem>>, %arg5: memref<2x128xf32, #tpu.memory_space<vmem>>) attributes {dimension_semantics = [#tpu.dimension_semantics<arbitrary>], iteration_bounds = array<i64: 1>, scalar_prefetch = 0 : i64, scratch_operands = 0 : i64, tpu.core_type = #tpu.core_type<tc>, window_params = [{pipeline_mode = #tpu.pipeline_mode<synchronous>, transform_indices = @transform_0, window_bounds = array<i64: 2, 64>}, {pipeline_mode = #tpu.pipeline_mode<synchronous>, transform_indices = @transform_1, window_bounds = array<i64: 2, 128>}, {pipeline_mode = #tpu.pipeline_mode<synchronous>, transform_indices = @transform_2, window_bounds = array<i64: 4, 16, 96>}, {pipeline_mode = #tpu.pipeline_mode<synchronous>, transform_indices = @transform_3, window_bounds = array<i64: 4, 32, 96>}, {pipeline_mode = #tpu.pipeline_mode<synchronous>, transform_indices = @transform_4, window_bounds = array<i64: 2, 128>}]} {
    %c0 = arith.constant 0 : index
    %c0_0 = arith.constant 0 : index
    %0 = vector.load %arg1[%c0, %c0_0] : memref<2x64xf32, #tpu.memory_space<vmem>>, vector<2x16xf32>
    %c0_1 = arith.constant 0 : index
    %c0_2 = arith.constant 0 : index
    %1 = vector.load %arg2[%c0_1, %c0_2] : memref<2x128xf32, #tpu.memory_space<vmem>>, vector<2x32xf32>
    %c0_3 = arith.constant 0 : index
    %c0_4 = arith.constant 0 : index
    %c0_5 = arith.constant 0 : index
    %2 = vector.load %arg3[%c0_3, %c0_4, %c0_5] : memref<4x16x96xf32, #tpu.memory_space<vmem>>, vector<1x16x96xf32>
    %3 = vector.shape_cast %2 : vector<1x16x96xf32> to vector<16x96xf32>
    %c0_6 = arith.constant 0 : index
    %c0_7 = arith.constant 0 : index
    %c0_8 = arith.constant 0 : index
    %4 = vector.load %arg4[%c0_6, %c0_7, %c0_8] : memref<4x32x96xf32, #tpu.memory_space<vmem>>, vector<1x32x96xf32>
    %5 = vector.shape_cast %4 : vector<1x32x96xf32> to vector<32x96xf32>
    %cst = arith.constant dense<0.000000e+00> : vector<2x96xf32>
    %6 = tpu.matmul %0, %3, %cst {dimension_numbers = #tpu.dot_dimension_numbers<[1], [0], [0], [1], [0, 0, 1, 1], [], []>} : vector<2x16xf32>, vector<16x96xf32>, vector<2x96xf32> -> vector<2x96xf32>
    %cst_9 = arith.constant dense<0.000000e+00> : vector<2x96xf32>
    %7 = tpu.matmul %1, %5, %cst_9 {dimension_numbers = #tpu.dot_dimension_numbers<[1], [0], [0], [1], [0, 0, 1, 1], [], []>} : vector<2x32xf32>, vector<32x96xf32>, vector<2x96xf32> -> vector<2x96xf32>
    %8 = vector.extract_strided_slice %6 {offsets = [0, 0], sizes = [2, 32], strides = [1, 1]} : vector<2x96xf32> to vector<2x32xf32>
    %9 = vector.extract_strided_slice %7 {offsets = [0, 0], sizes = [2, 32], strides = [1, 1]} : vector<2x96xf32> to vector<2x32xf32>
    %10 = arith.addf %8, %9 : vector<2x32xf32>
    %11 = arith.negf %10 : vector<2x32xf32>
    %12 = math.exp %11 : vector<2x32xf32>
    %cst_10 = arith.constant 1.000000e+00 : f32
    %13 = vector.broadcast %cst_10 : f32 to vector<2x32xf32>
    %14 = arith.addf %13, %12 : vector<2x32xf32>
    %15 = arith.divf %13, %14 : vector<2x32xf32>
    %16 = vector.extract_strided_slice %6 {offsets = [0, 32], sizes = [2, 32], strides = [1, 1]} : vector<2x96xf32> to vector<2x32xf32>
    %17 = vector.extract_strided_slice %7 {offsets = [0, 32], sizes = [2, 32], strides = [1, 1]} : vector<2x96xf32> to vector<2x32xf32>
    %18 = arith.addf %16, %17 : vector<2x32xf32>
    %19 = arith.negf %18 : vector<2x32xf32>
    %20 = math.exp %19 : vector<2x32xf32>
    %cst_11 = arith.constant 1.000000e+00 : f32
    %21 = vector.broadcast %cst_11 : f32 to vector<2x32xf32>
    %22 = arith.addf %21, %20 : vector<2x32xf32>
    %23 = arith.divf %21, %22 : vector<2x32xf32>
    %24 = vector.extract_strided_slice %6 {offsets = [0, 64], sizes = [2, 32], strides = [1, 1]} : vector<2x96xf32> to vector<2x32xf32>
    %25 = vector.extract_strided_slice %7 {offsets = [0, 64], sizes = [2, 32], strides = [1, 1]} : vector<2x96xf32> to vector<2x32xf32>
    %26 = arith.mulf %15, %25 : vector<2x32xf32>
    %27 = arith.addf %24, %26 : vector<2x32xf32>
    %28 = math.tanh %27 : vector<2x32xf32>
    %29 = arith.subf %1, %28 : vector<2x32xf32>
    %30 = arith.mulf %23, %29 : vector<2x32xf32>
    %31 = arith.addf %28, %30 : vector<2x32xf32>
    %c0_12 = arith.constant 0 : index
    %c16 = arith.constant 16 : index
    %32 = vector.load %arg1[%c0_12, %c16] : memref<2x64xf32, #tpu.memory_space<vmem>>, vector<2x16xf32>
    %c0_13 = arith.constant 0 : index
    %c32 = arith.constant 32 : index
    %33 = vector.load %arg2[%c0_13, %c32] : memref<2x128xf32, #tpu.memory_space<vmem>>, vector<2x32xf32>
    %c1 = arith.constant 1 : index
    %c0_14 = arith.constant 0 : index
    %c0_15 = arith.constant 0 : index
    %34 = vector.load %arg3[%c1, %c0_14, %c0_15] : memref<4x16x96xf32, #tpu.memory_space<vmem>>, vector<1x16x96xf32>
    %35 = vector.shape_cast %34 : vector<1x16x96xf32> to vector<16x96xf32>
    %c1_16 = arith.constant 1 : index
    %c0_17 = arith.constant 0 : index
    %c0_18 = arith.constant 0 : index
    %36 = vector.load %arg4[%c1_16, %c0_17, %c0_18] : memref<4x32x96xf32, #tpu.memory_space<vmem>>, vector<1x32x96xf32>
    %37 = vector.shape_cast %36 : vector<1x32x96xf32> to vector<32x96xf32>
    %cst_19 = arith.constant dense<0.000000e+00> : vector<2x96xf32>
    %38 = tpu.matmul %32, %35, %cst_19 {dimension_numbers = #tpu.dot_dimension_numbers<[1], [0], [0], [1], [0, 0, 1, 1], [], []>} : vector<2x16xf32>, vector<16x96xf32>, vector<2x96xf32> -> vector<2x96xf32>
    %cst_20 = arith.constant dense<0.000000e+00> : vector<2x96xf32>
    %39 = tpu.matmul %33, %37, %cst_20 {dimension_numbers = #tpu.dot_dimension_numbers<[1], [0], [0], [1], [0, 0, 1, 1], [], []>} : vector<2x32xf32>, vector<32x96xf32>, vector<2x96xf32> -> vector<2x96xf32>
    %40 = vector.extract_strided_slice %38 {offsets = [0, 0], sizes = [2, 32], strides = [1, 1]} : vector<2x96xf32> to vector<2x32xf32>
    %41 = vector.extract_strided_slice %39 {offsets = [0, 0], sizes = [2, 32], strides = [1, 1]} : vector<2x96xf32> to vector<2x32xf32>
    %42 = arith.addf %40, %41 : vector<2x32xf32>
    %43 = arith.negf %42 : vector<2x32xf32>
    %44 = math.exp %43 : vector<2x32xf32>
    %cst_21 = arith.constant 1.000000e+00 : f32
    %45 = vector.broadcast %cst_21 : f32 to vector<2x32xf32>
    %46 = arith.addf %45, %44 : vector<2x32xf32>
    %47 = arith.divf %45, %46 : vector<2x32xf32>
    %48 = vector.extract_strided_slice %38 {offsets = [0, 32], sizes = [2, 32], strides = [1, 1]} : vector<2x96xf32> to vector<2x32xf32>
    %49 = vector.extract_strided_slice %39 {offsets = [0, 32], sizes = [2, 32], strides = [1, 1]} : vector<2x96xf32> to vector<2x32xf32>
    %50 = arith.addf %48, %49 : vector<2x32xf32>
    %51 = arith.negf %50 : vector<2x32xf32>
    %52 = math.exp %51 : vector<2x32xf32>
    %cst_22 = arith.constant 1.000000e+00 : f32
    %53 = vector.broadcast %cst_22 : f32 to vector<2x32xf32>
    %54 = arith.addf %53, %52 : vector<2x32xf32>
    %55 = arith.divf %53, %54 : vector<2x32xf32>
    %56 = vector.extract_strided_slice %38 {offsets = [0, 64], sizes = [2, 32], strides = [1, 1]} : vector<2x96xf32> to vector<2x32xf32>
    %57 = vector.extract_strided_slice %39 {offsets = [0, 64], sizes = [2, 32], strides = [1, 1]} : vector<2x96xf32> to vector<2x32xf32>
    %58 = arith.mulf %47, %57 : vector<2x32xf32>
    %59 = arith.addf %56, %58 : vector<2x32xf32>
    %60 = math.tanh %59 : vector<2x32xf32>
    %61 = arith.subf %33, %60 : vector<2x32xf32>
    %62 = arith.mulf %55, %61 : vector<2x32xf32>
    %63 = arith.addf %60, %62 : vector<2x32xf32>
    %c0_23 = arith.constant 0 : index
    %c32_24 = arith.constant 32 : index
    %64 = vector.load %arg1[%c0_23, %c32_24] : memref<2x64xf32, #tpu.memory_space<vmem>>, vector<2x16xf32>
    %c0_25 = arith.constant 0 : index
    %c64 = arith.constant 64 : index
    %65 = vector.load %arg2[%c0_25, %c64] : memref<2x128xf32, #tpu.memory_space<vmem>>, vector<2x32xf32>
    %c2 = arith.constant 2 : index
    %c0_26 = arith.constant 0 : index
    %c0_27 = arith.constant 0 : index
    %66 = vector.load %arg3[%c2, %c0_26, %c0_27] : memref<4x16x96xf32, #tpu.memory_space<vmem>>, vector<1x16x96xf32>
    %67 = vector.shape_cast %66 : vector<1x16x96xf32> to vector<16x96xf32>
    %c2_28 = arith.constant 2 : index
    %c0_29 = arith.constant 0 : index
    %c0_30 = arith.constant 0 : index
    %68 = vector.load %arg4[%c2_28, %c0_29, %c0_30] : memref<4x32x96xf32, #tpu.memory_space<vmem>>, vector<1x32x96xf32>
    %69 = vector.shape_cast %68 : vector<1x32x96xf32> to vector<32x96xf32>
    %cst_31 = arith.constant dense<0.000000e+00> : vector<2x96xf32>
    %70 = tpu.matmul %64, %67, %cst_31 {dimension_numbers = #tpu.dot_dimension_numbers<[1], [0], [0], [1], [0, 0, 1, 1], [], []>} : vector<2x16xf32>, vector<16x96xf32>, vector<2x96xf32> -> vector<2x96xf32>
    %cst_32 = arith.constant dense<0.000000e+00> : vector<2x96xf32>
    %71 = tpu.matmul %65, %69, %cst_32 {dimension_numbers = #tpu.dot_dimension_numbers<[1], [0], [0], [1], [0, 0, 1, 1], [], []>} : vector<2x32xf32>, vector<32x96xf32>, vector<2x96xf32> -> vector<2x96xf32>
    %72 = vector.extract_strided_slice %70 {offsets = [0, 0], sizes = [2, 32], strides = [1, 1]} : vector<2x96xf32> to vector<2x32xf32>
    %73 = vector.extract_strided_slice %71 {offsets = [0, 0], sizes = [2, 32], strides = [1, 1]} : vector<2x96xf32> to vector<2x32xf32>
    %74 = arith.addf %72, %73 : vector<2x32xf32>
    %75 = arith.negf %74 : vector<2x32xf32>
    %76 = math.exp %75 : vector<2x32xf32>
    %cst_33 = arith.constant 1.000000e+00 : f32
    %77 = vector.broadcast %cst_33 : f32 to vector<2x32xf32>
    %78 = arith.addf %77, %76 : vector<2x32xf32>
    %79 = arith.divf %77, %78 : vector<2x32xf32>
    %80 = vector.extract_strided_slice %70 {offsets = [0, 32], sizes = [2, 32], strides = [1, 1]} : vector<2x96xf32> to vector<2x32xf32>
    %81 = vector.extract_strided_slice %71 {offsets = [0, 32], sizes = [2, 32], strides = [1, 1]} : vector<2x96xf32> to vector<2x32xf32>
    %82 = arith.addf %80, %81 : vector<2x32xf32>
    %83 = arith.negf %82 : vector<2x32xf32>
    %84 = math.exp %83 : vector<2x32xf32>
    %cst_34 = arith.constant 1.000000e+00 : f32
    %85 = vector.broadcast %cst_34 : f32 to vector<2x32xf32>
    %86 = arith.addf %85, %84 : vector<2x32xf32>
    %87 = arith.divf %85, %86 : vector<2x32xf32>
    %88 = vector.extract_strided_slice %70 {offsets = [0, 64], sizes = [2, 32], strides = [1, 1]} : vector<2x96xf32> to vector<2x32xf32>
    %89 = vector.extract_strided_slice %71 {offsets = [0, 64], sizes = [2, 32], strides = [1, 1]} : vector<2x96xf32> to vector<2x32xf32>
    %90 = arith.mulf %79, %89 : vector<2x32xf32>
    %91 = arith.addf %88, %90 : vector<2x32xf32>
    %92 = math.tanh %91 : vector<2x32xf32>
    %93 = arith.subf %65, %92 : vector<2x32xf32>
    %94 = arith.mulf %87, %93 : vector<2x32xf32>
    %95 = arith.addf %92, %94 : vector<2x32xf32>
    %c0_35 = arith.constant 0 : index
    %c48 = arith.constant 48 : index
    %96 = vector.load %arg1[%c0_35, %c48] : memref<2x64xf32, #tpu.memory_space<vmem>>, vector<2x16xf32>
    %c0_36 = arith.constant 0 : index
    %c96 = arith.constant 96 : index
    %97 = vector.load %arg2[%c0_36, %c96] : memref<2x128xf32, #tpu.memory_space<vmem>>, vector<2x32xf32>
    %c3 = arith.constant 3 : index
    %c0_37 = arith.constant 0 : index
    %c0_38 = arith.constant 0 : index
    %98 = vector.load %arg3[%c3, %c0_37, %c0_38] : memref<4x16x96xf32, #tpu.memory_space<vmem>>, vector<1x16x96xf32>
    %99 = vector.shape_cast %98 : vector<1x16x96xf32> to vector<16x96xf32>
    %c3_39 = arith.constant 3 : index
    %c0_40 = arith.constant 0 : index
    %c0_41 = arith.constant 0 : index
    %100 = vector.load %arg4[%c3_39, %c0_40, %c0_41] : memref<4x32x96xf32, #tpu.memory_space<vmem>>, vector<1x32x96xf32>
    %101 = vector.shape_cast %100 : vector<1x32x96xf32> to vector<32x96xf32>
    %cst_42 = arith.constant dense<0.000000e+00> : vector<2x96xf32>
    %102 = tpu.matmul %96, %99, %cst_42 {dimension_numbers = #tpu.dot_dimension_numbers<[1], [0], [0], [1], [0, 0, 1, 1], [], []>} : vector<2x16xf32>, vector<16x96xf32>, vector<2x96xf32> -> vector<2x96xf32>
    %cst_43 = arith.constant dense<0.000000e+00> : vector<2x96xf32>
    %103 = tpu.matmul %97, %101, %cst_43 {dimension_numbers = #tpu.dot_dimension_numbers<[1], [0], [0], [1], [0, 0, 1, 1], [], []>} : vector<2x32xf32>, vector<32x96xf32>, vector<2x96xf32> -> vector<2x96xf32>
    %104 = vector.extract_strided_slice %102 {offsets = [0, 0], sizes = [2, 32], strides = [1, 1]} : vector<2x96xf32> to vector<2x32xf32>
    %105 = vector.extract_strided_slice %103 {offsets = [0, 0], sizes = [2, 32], strides = [1, 1]} : vector<2x96xf32> to vector<2x32xf32>
    %106 = arith.addf %104, %105 : vector<2x32xf32>
    %107 = arith.negf %106 : vector<2x32xf32>
    %108 = math.exp %107 : vector<2x32xf32>
    %cst_44 = arith.constant 1.000000e+00 : f32
    %109 = vector.broadcast %cst_44 : f32 to vector<2x32xf32>
    %110 = arith.addf %109, %108 : vector<2x32xf32>
    %111 = arith.divf %109, %110 : vector<2x32xf32>
    %112 = vector.extract_strided_slice %102 {offsets = [0, 32], sizes = [2, 32], strides = [1, 1]} : vector<2x96xf32> to vector<2x32xf32>
    %113 = vector.extract_strided_slice %103 {offsets = [0, 32], sizes = [2, 32], strides = [1, 1]} : vector<2x96xf32> to vector<2x32xf32>
    %114 = arith.addf %112, %113 : vector<2x32xf32>
    %115 = arith.negf %114 : vector<2x32xf32>
    %116 = math.exp %115 : vector<2x32xf32>
    %cst_45 = arith.constant 1.000000e+00 : f32
    %117 = vector.broadcast %cst_45 : f32 to vector<2x32xf32>
    %118 = arith.addf %117, %116 : vector<2x32xf32>
    %119 = arith.divf %117, %118 : vector<2x32xf32>
    %120 = vector.extract_strided_slice %102 {offsets = [0, 64], sizes = [2, 32], strides = [1, 1]} : vector<2x96xf32> to vector<2x32xf32>
    %121 = vector.extract_strided_slice %103 {offsets = [0, 64], sizes = [2, 32], strides = [1, 1]} : vector<2x96xf32> to vector<2x32xf32>
    %122 = arith.mulf %111, %121 : vector<2x32xf32>
    %123 = arith.addf %120, %122 : vector<2x32xf32>
    %124 = math.tanh %123 : vector<2x32xf32>
    %125 = arith.subf %97, %124 : vector<2x32xf32>
    %126 = arith.mulf %119, %125 : vector<2x32xf32>
    %127 = arith.addf %124, %126 : vector<2x32xf32>
    %128 = tpu.concatenate %31, %63, %95, %127 in 1 : vector<2x32xf32>, vector<2x32xf32>, vector<2x32xf32>, vector<2x32xf32> -> vector<2x128xf32>
    %c0_46 = arith.constant 0 : index
    %c0_47 = arith.constant 0 : index
    %129 = vector.load %arg5[%c0_46, %c0_47] : memref<2x128xf32, #tpu.memory_space<vmem>>, vector<2x128xf32>
    tpu.vector_store %arg5[%c0_46, %c0_47], %128 {strides = array<i32>} : memref<2x128xf32, #tpu.memory_space<vmem>>, vector<2x128xf32>,
    return
  }
  func.func @transform_0(%arg0: i32) -> (i32, i32) {
    %c0_i32 = arith.constant 0 : i32
    %c0_i32_0 = arith.constant 0 : i32
    %c0_i32_1 = arith.constant 0 : i32
    return %c0_i32, %c0_i32_0 : i32, i32
  }
  func.func @transform_1(%arg0: i32) -> (i32, i32) {
    %c0_i32 = arith.constant 0 : i32
    %c0_i32_0 = arith.constant 0 : i32
    %c0_i32_1 = arith.constant 0 : i32
    return %c0_i32, %c0_i32_0 : i32, i32
  }
  func.func @transform_2(%arg0: i32) -> (i32, i32, i32) {
    %c0_i32 = arith.constant 0 : i32
    %c0_i32_0 = arith.constant 0 : i32
    %c0_i32_1 = arith.constant 0 : i32
    %c0_i32_2 = arith.constant 0 : i32
    return %c0_i32, %c0_i32_0, %c0_i32_1 : i32, i32, i32
  }
  func.func @transform_3(%arg0: i32) -> (i32, i32, i32) {
    %c0_i32 = arith.constant 0 : i32
    %c0_i32_0 = arith.constant 0 : i32
    %c0_i32_1 = arith.constant 0 : i32
    %c0_i32_2 = arith.constant 0 : i32
    return %c0_i32, %c0_i32_0, %c0_i32_1 : i32, i32, i32
  }
  func.func @transform_4(%arg0: i32) -> (i32, i32) {
    %c0_i32 = arith.constant 0 : i32
    %c0_i32_0 = arith.constant 0 : i32
    %c0_i32_1 = arith.constant 0 : i32
    return %c0_i32, %c0_i32_0 : i32, i32
  }
}

</mosaic_0001>

<llo_original>
// kernel: group_gru_cell.1
$region0: #{group_gru_cell.1}
  #allocation0 [shape = 'u32[]', space=smem, size = 0x4, offset = 0x4, fixed_abs, tag = 'smem constant byte address 0x4 - core index']
  #allocation1 [shape = 'u32[144,128]{1,0:T(1,128)}', space=vmem, size = 0x12000, scoped, tag = 'internal scratch']
  %s0 = inlined_call_operand.vmem [shape: f32[2,64], index: 0, kind: input, shape index: {}]
  %s1 = inlined_call_operand.vmem [shape: f32[2,128], index: 1, kind: input, shape index: {}]
  %s2 = inlined_call_operand.hbm [shape: f32[4,16,96], index: 2, kind: input, shape index: {}]
  %s3 = inlined_call_operand.hbm [shape: f32[4,32,96], index: 3, kind: input, shape index: {}]
  %s4 = inlined_call_operand.vmem [shape: f32[2,128], index: 4, kind: output, shape index: {}]
  %s5 = sld [smem:[#allocation0]]
  $region34: #{group_gru_cell.1} parent=0
    _
  %s7 = ssub.s32 1, %s5
  %s8 = scalar_select 0, %s7, %s5
  $region1: #{group_gru_cell.1} parent=0
    #allocation2 [shape = 'u8[32768]{0}', space=vmem, size = 0x8000, scoped, tag = 'input window, operand 2, single buffered']
    #allocation3 [shape = 's32[1]{0}', space=sflag, size = 0x4, scoped, tag = 'scoped memory for group_gru_cell.1']
    #allocation4 [shape = 'u8[65536]{0}', space=vmem, size = 0x10000, scoped, tag = 'input window, operand 3, single buffered']
    #allocation5 [shape = 's32[1]{0}', space=sflag, size = 0x4, scoped, tag = 'scoped memory for group_gru_cell.1']
    %9 = vsyncpa [#allocation3], 0
    %10 = vsyncpa [#allocation5], 0
    // Predicated region
    $region2: #{group_gru_cell.1} parent=1 // pred_check
      _
    $region3: #{group_gru_cell.1} parent=1 // pred_check_branch
      %12 = sbr.rel (0) target = $region5
    $region4: #{group_gru_cell.1} parent=1 // pred_region
      _
    $region5: #{group_gru_cell.1} parent=1 // pred_fallthru
      _
    // Predicated region
    $region6: #{group_gru_cell.1} parent=1 // pred_check
      _
    $region7: #{group_gru_cell.1} parent=1 // pred_check_branch
      %14 = sbr.rel (0) target = $region9
    $region8: #{group_gru_cell.1} parent=1 // pred_region
      _
    $region9: #{group_gru_cell.1} parent=1 // pred_fallthru
      _
    // Predicated region
    $region10: #{group_gru_cell.1} parent=1 // pred_check
      _
    $region11: #{group_gru_cell.1} parent=1 // pred_check_branch
      %16 = sbr.rel (0) target = $region13
    $region12: #{group_gru_cell.1} parent=1 // pred_region
      %s18 = ssub.s32 1024, 1024
      %19 = vsyncadd [#allocation3], %s18
      %s20 = sshll.u32 [#allocation2], 4
      %s21 = int_to_ptr.vmem [resolvable:$true] %s20
      %26 = dma.hbm_to_vmem [thread:$0]  %s2, 1024, %s21, [#allocation3], 128, 128, 8
    $region13: #{group_gru_cell.1} parent=1 // pred_fallthru
      _
    // Predicated region
    $region14: #{group_gru_cell.1} parent=1 // pred_check
      _
    $region15: #{group_gru_cell.1} parent=1 // pred_check_branch
      %28 = sbr.rel (0) target = $region17
    $region16: #{group_gru_cell.1} parent=1 // pred_region
      %s30 = ssub.s32 2048, 2048
      %31 = vsyncadd [#allocation5], %s30
      %s32 = sshll.u32 [#allocation4], 4
      %s33 = int_to_ptr.vmem [resolvable:$true] %s32
      %38 = dma.hbm_to_vmem [thread:$0]  %s3, 2048, %s33, [#allocation5], 128, 128, 8
    $region17: #{group_gru_cell.1} parent=1 // pred_fallthru
      _
    // Predicated region
    $region18: #{group_gru_cell.1} parent=1 // pred_check
      _
    $region19: #{group_gru_cell.1} parent=1 // pred_check_branch
      %40 = sbr.rel (0) target = $region21
    $region20: #{group_gru_cell.1} parent=1 // pred_region
      %41 = dma.done [#allocation3], 1024
    $region21: #{group_gru_cell.1} parent=1 // pred_fallthru
      _
    // Predicated region
    $region22: #{group_gru_cell.1} parent=1 // pred_check
      _
    $region23: #{group_gru_cell.1} parent=1 // pred_check_branch
      %43 = sbr.rel (0) target = $region25
    $region24: #{group_gru_cell.1} parent=1 // pred_region
      %44 = dma.done [#allocation5], 2048
    $region25: #{group_gru_cell.1} parent=1 // pred_fallthru
      _
    %v45 = vld [vmem:[%s0] sm:$0x3]
    %v46 = vld [vmem:[%s1] sm:$0x3]
    %v47 = vld [vmem:[#allocation2] sm:$0xff]
    %v48 = vld [vmem:[#allocation2 + $0x8] sm:$0xff]
    %v49 = vld [vmem:[#allocation4] sm:$0xff]
    %v50 = vld [vmem:[#allocation4 + $0x8] sm:$0xff]
    %v51 = vld [vmem:[#allocation4 + $0x10] sm:$0xff]
    %v52 = vld [vmem:[#allocation4 + $0x18] sm:$0xff]
    %vm53 = vcmask 130048
    %v55 = vsel %vm53, %v45, 0
    %57 = vmatprep.subr.mxu0 0.0
    %58 = vmatpush1.msra.mxu0 0.0
    %59 = vmatprep.subr.mxu0 0.0
    %60 = vmatpush1.msra.mxu0 0.0
    %61 = vmatprep.subr.mxu0 0.0
    %62 = vmatpush1.msra.mxu0 0.0
    %63 = vmatprep.subr.mxu0 0.0
    %64 = vmatpush1.msra.mxu0 0.0
    %65 = vmatprep.subr.mxu0 0.0
    %66 = vmatpush1.msra.mxu0 0.0
    %67 = vmatprep.subr.mxu0 0.0
    %68 = vmatpush1.msra.mxu0 0.0
    %69 = vmatprep.subr.mxu0 0.0
    %70 = vmatpush1.msra.mxu0 0.0
    %71 = vmatprep.subr.mxu0 0.0
    %72 = vmatpush1.msra.mxu0 0.0
    %73 = vmatprep.subr.mxu0 0.0
    %74 = vmatpush1.msra.mxu0 0.0
    %75 = vmatprep.subr.mxu0 0.0
    %76 = vmatpush1.msra.mxu0 0.0
    %77 = vmatprep.subr.mxu0 0.0
    %78 = vmatpush1.msra.mxu0 0.0
    %79 = vmatprep.subr.mxu0 0.0
    %80 = vmatpush1.msra.mxu0 0.0
    %81 = vmatprep.subr.mxu0 0.0
    %82 = vmatpush1.msra.mxu0 0.0
    %83 = vmatprep.subr.mxu0 0.0
    %84 = vmatpush1.msra.mxu0 0.0
    %85 = vmatprep.subr.mxu0 0.0
    %86 = vmatpush1.msra.mxu0 %v48
    %87 = vmatprep.subr.mxu0 0.0
    %88 = vmatpush1.msra.mxu0 %v47
    %89 = vmatprep.subr.mxu0 0.0
    %90 = vmatpush2.msra.mxu0 0.0
    %91 = vmatprep.subr.mxu0 0.0
    %92 = vmatpush2.msra.mxu0 0.0
    %93 = vmatprep.subr.mxu0 0.0
    %94 = vmatpush2.msra.mxu0 0.0
    %95 = vmatprep.subr.mxu0 0.0
    %96 = vmatpush2.msra.mxu0 0.0
    %97 = vmatprep.subr.mxu0 0.0
    %98 = vmatpush2.msra.mxu0 0.0
    %99 = vmatprep.subr.mxu0 0.0
    %100 = vmatpush2.msra.mxu0 0.0
    %101 = vmatprep.subr.mxu0 0.0
    %102 = vmatpush2.msra.mxu0 0.0
    %103 = vmatprep.subr.mxu0 0.0
    %104 = vmatpush2.msra.mxu0 0.0
    %105 = vmatprep.subr.mxu0 0.0
    %106 = vmatpush2.msra.mxu0 0.0
    %107 = vmatprep.subr.mxu0 0.0
    %108 = vmatpush2.msra.mxu0 0.0
    %109 = vmatprep.subr.mxu0 0.0
    %110 = vmatpush2.msra.mxu0 0.0
    %111 = vmatprep.subr.mxu0 0.0
    %112 = vmatpush2.msra.mxu0 0.0
    %113 = vmatprep.subr.mxu0 0.0
    %114 = vmatpush2.msra.mxu0 0.0
    %115 = vmatprep.subr.mxu0 0.0
    %116 = vmatpush2.msra.mxu0 0.0
    %117 = vmatprep.subr.mxu0 0.0
    %118 = vmatpush2.msra.mxu0 0.0
    %119 = vmatprep.subr.mxu0 0.0
    %120 = vmatpush2.msra.mxu0 0.0
    %121 = vmatprep.mubr.f32.mxu0 0.0
    %122 = vmatmul.mubr.f32.gmra.mxu0 %v55
    %v123 = vpop.f32.mrf.mxu0
    %v124 = vadd.f32 0.0, %v123
    %v125 = vpop.f32.mrf.mxu0
    %126 = vdwg.mxu0
    %vm127 = vcmask 261120
    %v129 = vsel %vm127, %v46, 0
    %131 = vmatprep.subr.mxu0 0.0
    %132 = vmatpush1.msra.mxu0 0.0
    %133 = vmatprep.subr.mxu0 0.0
    %134 = vmatpush1.msra.mxu0 0.0
    %135 = vmatprep.subr.mxu0 0.0
    %136 = vmatpush1.msra.mxu0 0.0
    %137 = vmatprep.subr.mxu0 0.0
    %138 = vmatpush1.msra.mxu0 0.0
    %139 = vmatprep.subr.mxu0 0.0
    %140 = vmatpush1.msra.mxu0 0.0
    %141 = vmatprep.subr.mxu0 0.0
    %142 = vmatpush1.msra.mxu0 0.0
    %143 = vmatprep.subr.mxu0 0.0
    %144 = vmatpush1.msra.mxu0 0.0
    %145 = vmatprep.subr.mxu0 0.0
    %146 = vmatpush1.msra.mxu0 0.0
    %147 = vmatprep.subr.mxu0 0.0
    %148 = vmatpush1.msra.mxu0 0.0
    %149 = vmatprep.subr.mxu0 0.0
    %150 = vmatpush1.msra.mxu0 0.0
    %151 = vmatprep.subr.mxu0 0.0
    %152 = vmatpush1.msra.mxu0 0.0
    %153 = vmatprep.subr.mxu0 0.0
    %154 = vmatpush1.msra.mxu0 0.0
    %155 = vmatprep.subr.mxu0 0.0
    %156 = vmatpush1.msra.mxu0 %v52
    %157 = vmatprep.subr.mxu0 0.0
    %158 = vmatpush1.msra.mxu0 %v51
    %159 = vmatprep.subr.mxu0 0.0
    %160 = vmatpush1.msra.mxu0 %v50
    %161 = vmatprep.subr.mxu0 0.0
    %162 = vmatpush1.msra.mxu0 %v49
    %163 = vmatprep.subr.mxu0 0.0
    %164 = vmatpush2.msra.mxu0 0.0
    %165 = vmatprep.subr.mxu0 0.0
    %166 = vmatpush2.msra.mxu0 0.0
    %167 = vmatprep.subr.mxu0 0.0
    %168 = vmatpush2.msra.mxu0 0.0
    %169 = vmatprep.subr.mxu0 0.0
    %170 = vmatpush2.msra.mxu0 0.0
    %171 = vmatprep.subr.mxu0 0.0
    %172 = vmatpush2.msra.mxu0 0.0
    %173 = vmatprep.subr.mxu0 0.0
    %174 = vmatpush2.msra.mxu0 0.0
    %175 = vmatprep.subr.mxu0 0.0
    %176 = vmatpush2.msra.mxu0 0.0
    %177 = vmatprep.subr.mxu0 0.0
    %178 = vmatpush2.msra.mxu0 0.0
    %179 = vmatprep.subr.mxu0 0.0
    %180 = vmatpush2.msra.mxu0 0.0
    %181 = vmatprep.subr.mxu0 0.0
    %182 = vmatpush2.msra.mxu0 0.0
    %183 = vmatprep.subr.mxu0 0.0
    %184 = vmatpush2.msra.mxu0 0.0
    %185 = vmatprep.subr.mxu0 0.0
    %186 = vmatpush2.msra.mxu0 0.0
    %187 = vmatprep.subr.mxu0 0.0
    %188 = vmatpush2.msra.mxu0 0.0
    %189 = vmatprep.subr.mxu0 0.0
    %190 = vmatpush2.msra.mxu0 0.0
    %191 = vmatprep.subr.mxu0 0.0
    %192 = vmatpush2.msra.mxu0 0.0
    %193 = vmatprep.subr.mxu0 0.0
    %194 = vmatpush2.msra.mxu0 0.0
    %195 = vmatprep.mubr.f32.mxu0 0.0
    %196 = vmatmul.mubr.f32.gmra.mxu0 %v129
    %v197 = vpop.f32.mrf.mxu0
    %v198 = vadd.f32 0.0, %v197
    %v199 = vpop.f32.mrf.mxu0
    %200 = vdwg.mxu0
    %v201 = vadd.f32 %v124, %v198
    %v202 = vxor.u32 %v201, 2147483648
    %v203 = vmul.f32 %v202, 1.442695
    %v204 = vpow.pop %v203
    %v205 = vadd.f32 %v204, 1.0
    %v206 = vrcp.pop %v205
    %v207 = vmul.f32 1.0, %v206
    %209 = vrot.lane.b32.xlu0 %v198, 64
    %v210 = vpop.permute.xlu0 %209
    %v212 = vmul.f32 %v207, %v210
    %214 = vrot.lane.b32.xlu0 %v212, 64
    %v215 = vpop.permute.xlu0 %214
    %v217 = vadd.f32 %v124, %v215
    %v218 = vtanh.pop %v217
    %220 = vrot.lane.b32.xlu0 %v218, 64
    %v221 = vpop.permute.xlu0 %220
    %v223 = vsub.f32 %v46, %v221
    %225 = vrot.lane.b32.xlu0 %v223, 32
    %v226 = vpop.permute.xlu0 %225
    %v228 = vmul.f32 %v207, %v226
    %230 = vrot.lane.b32.xlu0 %v228, 32
    %v231 = vpop.permute.xlu0 %230
    %v233 = vadd.f32 %v218, %v231
    %s234 = scalar_lea.vmem [#allocation2], 16
    %v235 = vld [vmem:[%s234] sm:$0xff]
    %v236 = vld [vmem:[%s234 + $0x8] sm:$0xff]
    %s237 = scalar_lea.vmem [#allocation4], 32
    %v238 = vld [vmem:[%s237] sm:$0xff]
    %v239 = vld [vmem:[%s237 + $0x8] sm:$0xff]
    %v240 = vld [vmem:[%s237 + $0x10] sm:$0xff]
    %v241 = vld [vmem:[%s237 + $0x18] sm:$0xff]
    %242 = vrot.lane.b32.xlu0 %v45, 112
    %v243 = vpop.permute.xlu0 %242
    %v244 = vsel %vm53, %v243, 0
    %246 = vmatprep.subr.mxu0 0.0
    %247 = vmatpush1.msra.mxu0 0.0
    %248 = vmatprep.subr.mxu0 0.0
    %249 = vmatpush1.msra.mxu0 0.0
    %250 = vmatprep.subr.mxu0 0.0
    %251 = vmatpush1.msra.mxu0 0.0
    %252 = vmatprep.subr.mxu0 0.0
    %253 = vmatpush1.msra.mxu0 0.0
    %254 = vmatprep.subr.mxu0 0.0
    %255 = vmatpush1.msra.mxu0 0.0
    %256 = vmatprep.subr.mxu0 0.0
    %257 = vmatpush1.msra.mxu0 0.0
    %258 = vmatprep.subr.mxu0 0.0
    %259 = vmatpush1.msra.mxu0 0.0
    %260 = vmatprep.subr.mxu0 0.0
    %261 = vmatpush1.msra.mxu0 0.0
    %262 = vmatprep.subr.mxu0 0.0
    %263 = vmatpush1.msra.mxu0 0.0
    %264 = vmatprep.subr.mxu0 0.0
    %265 = vmatpush1.msra.mxu0 0.0
    %266 = vmatprep.subr.mxu0 0.0
    %267 = vmatpush1.msra.mxu0 0.0
    %268 = vmatprep.subr.mxu0 0.0
    %269 = vmatpush1.msra.mxu0 0.0
    %270 = vmatprep.subr.mxu0 0.0
    %271 = vmatpush1.msra.mxu0 0.0
    %272 = vmatprep.subr.mxu0 0.0
    %273 = vmatpush1.msra.mxu0 0.0
    %274 = vmatprep.subr.mxu0 0.0
    %275 = vmatpush1.msra.mxu0 %v236
    %276 = vmatprep.subr.mxu0 0.0
    %277 = vmatpush1.msra.mxu0 %v235
    %278 = vmatprep.subr.mxu0 0.0
    %279 = vmatpush2.msra.mxu0 0.0
    %280 = vmatprep.subr.mxu0 0.0
    %281 = vmatpush2.msra.mxu0 0.0
    %282 = vmatprep.subr.mxu0 0.0
    %283 = vmatpush2.msra.mxu0 0.0
    %284 = vmatprep.subr.mxu0 0.0
    %285 = vmatpush2.msra.mxu0 0.0
    %286 = vmatprep.subr.mxu0 0.0
    %287 = vmatpush2.msra.mxu0 0.0
    %288 = vmatprep.subr.mxu0 0.0
    %289 = vmatpush2.msra.mxu0 0.0
    %290 = vmatprep.subr.mxu0 0.0
    %291 = vmatpush2.msra.mxu0 0.0
    %292 = vmatprep.subr.mxu0 0.0
    %293 = vmatpush2.msra.mxu0 0.0
    %294 = vmatprep.subr.mxu0 0.0
    %295 = vmatpush2.msra.mxu0 0.0
    %296 = vmatprep.subr.mxu0 0.0
    %297 = vmatpush2.msra.mxu0 0.0
    %298 = vmatprep.subr.mxu0 0.0
    %299 = vmatpush2.msra.mxu0 0.0
    %300 = vmatprep.subr.mxu0 0.0
    %301 = vmatpush2.msra.mxu0 0.0
    %302 = vmatprep.subr.mxu0 0.0
    %303 = vmatpush2.msra.mxu0 0.0
    %304 = vmatprep.subr.mxu0 0.0
    %305 = vmatpush2.msra.mxu0 0.0
    %306 = vmatprep.subr.mxu0 0.0
    %307 = vmatpush2.msra.mxu0 0.0
    %308 = vmatprep.subr.mxu0 0.0
    %309 = vmatpush2.msra.mxu0 0.0
    %310 = vmatprep.mubr.f32.mxu0 0.0
    %311 = vmatmul.mubr.f32.gmra.mxu0 %v244
    %v312 = vpop.f32.mrf.mxu0
    %v313 = vadd.f32 0.0, %v312
    %v314 = vpop.f32.mrf.mxu0
    %315 = vdwg.mxu0
    %316 = vrot.lane.b32.xlu0 %v46, 96
    %v317 = vpop.permute.xlu0 %316
    %v318 = vsel %vm127, %v317, 0
    %320 = vmatprep.subr.mxu0 0.0
    %321 = vmatpush1.msra.mxu0 0.0
    %322 = vmatprep.subr.mxu0 0.0
    %323 = vmatpush1.msra.mxu0 0.0
    %324 = vmatprep.subr.mxu0 0.0
    %325 = vmatpush1.msra.mxu0 0.0
    %326 = vmatprep.subr.mxu0 0.0
    %327 = vmatpush1.msra.mxu0 0.0
    %328 = vmatprep.subr.mxu0 0.0
    %329 = vmatpush1.msra.mxu0 0.0
    %330 = vmatprep.subr.mxu0 0.0
    %331 = vmatpush1.msra.mxu0 0.0
    %332 = vmatprep.subr.mxu0 0.0
    %333 = vmatpush1.msra.mxu0 0.0
    %334 = vmatprep.subr.mxu0 0.0
    %335 = vmatpush1.msra.mxu0 0.0
    %336 = vmatprep.subr.mxu0 0.0
    %337 = vmatpush1.msra.mxu0 0.0
    %338 = vmatprep.subr.mxu0 0.0
    %339 = vmatpush1.msra.mxu0 0.0
    %340 = vmatprep.subr.mxu0 0.0
    %341 = vmatpush1.msra.mxu0 0.0
    %342 = vmatprep.subr.mxu0 0.0
    %343 = vmatpush1.msra.mxu0 0.0
    %344 = vmatprep.subr.mxu0 0.0
    %345 = vmatpush1.msra.mxu0 %v241
    %346 = vmatprep.subr.mxu0 0.0
    %347 = vmatpush1.msra.mxu0 %v240
    %348 = vmatprep.subr.mxu0 0.0
    %349 = vmatpush1.msra.mxu0 %v239
    %350 = vmatprep.subr.mxu0 0.0
    %351 = vmatpush1.msra.mxu0 %v238
    %352 = vmatprep.subr.mxu0 0.0
    %353 = vmatpush2.msra.mxu0 0.0
    %354 = vmatprep.subr.mxu0 0.0
    %355 = vmatpush2.msra.mxu0 0.0
    %356 = vmatprep.subr.mxu0 0.0
    %357 = vmatpush2.msra.mxu0 0.0
    %358 = vmatprep.subr.mxu0 0.0
    %359 = vmatpush2.msra.mxu0 0.0
    %360 = vmatprep.subr.mxu0 0.0
    %361 = vmatpush2.msra.mxu0 0.0
    %362 = vmatprep.subr.mxu0 0.0
    %363 = vmatpush2.msra.mxu0 0.0
    %364 = vmatprep.subr.mxu0 0.0
    %365 = vmatpush2.msra.mxu0 0.0
    %366 = vmatprep.subr.mxu0 0.0
    %367 = vmatpush2.msra.mxu0 0.0
    %368 = vmatprep.subr.mxu0 0.0
    %369 = vmatpush2.msra.mxu0 0.0
    %370 = vmatprep.subr.mxu0 0.0
    %371 = vmatpush2.msra.mxu0 0.0
    %372 = vmatprep.subr.mxu0 0.0
    %373 = vmatpush2.msra.mxu0 0.0
    %374 = vmatprep.subr.mxu0 0.0
    %375 = vmatpush2.msra.mxu0 0.0
    %376 = vmatprep.subr.mxu0 0.0
    %377 = vmatpush2.msra.mxu0 0.0
    %378 = vmatprep.subr.mxu0 0.0
    %379 = vmatpush2.msra.mxu0 0.0
    %380 = vmatprep.subr.mxu0 0.0
    %381 = vmatpush2.msra.mxu0 0.0
    %382 = vmatprep.subr.mxu0 0.0
    %383 = vmatpush2.msra.mxu0 0.0
    %384 = vmatprep.mubr.f32.mxu0 0.0
    %385 = vmatmul.mubr.f32.gmra.mxu0 %v318
    %v386 = vpop.f32.mrf.mxu0
    %v387 = vadd.f32 0.0, %v386
    %v388 = vpop.f32.mrf.mxu0
    %389 = vdwg.mxu0
    %v390 = vadd.f32 %v313, %v387
    %v391 = vxor.u32 %v390, 2147483648
    %v392 = vmul.f32 %v391, 1.442695
    %v393 = vpow.pop %v392
    %v394 = vadd.f32 %v393, 1.0
    %v395 = vrcp.pop %v394
    %v396 = vmul.f32 1.0, %v395
    %398 = vrot.lane.b32.xlu0 %v387, 64
    %v399 = vpop.permute.xlu0 %398
    %v401 = vmul.f32 %v396, %v399
    %403 = vrot.lane.b32.xlu0 %v401, 64
    %v404 = vpop.permute.xlu0 %403
    %v406 = vadd.f32 %v313, %v404
    %v407 = vtanh.pop %v406
    %409 = vrot.lane.b32.xlu0 %v407, 96
    %v410 = vpop.permute.xlu0 %409
    %v412 = vsub.f32 %v46, %v410
    %v413 = vmul.f32 %v396, %v412
    %415 = vrot.lane.b32.xlu0 %v413, 32
    %v416 = vpop.permute.xlu0 %415
    %v418 = vadd.f32 %v407, %v416
    %s419 = scalar_lea.vmem [#allocation2], 32
    %v420 = vld [vmem:[%s419] sm:$0xff]
    %v421 = vld [vmem:[%s419 + $0x8] sm:$0xff]
    %s422 = scalar_lea.vmem [#allocation4], 64
    %v423 = vld [vmem:[%s422] sm:$0xff]
    %v424 = vld [vmem:[%s422 + $0x8] sm:$0xff]
    %v425 = vld [vmem:[%s422 + $0x10] sm:$0xff]
    %v426 = vld [vmem:[%s422 + $0x18] sm:$0xff]
    %427 = vrot.lane.b32.xlu0 %v45, 96
    %v428 = vpop.permute.xlu0 %427
    %v429 = vsel %vm53, %v428, 0
    %431 = vmatprep.subr.mxu0 0.0
    %432 = vmatpush1.msra.mxu0 0.0
    %433 = vmatprep.subr.mxu0 0.0
    %434 = vmatpush1.msra.mxu0 0.0
    %435 = vmatprep.subr.mxu0 0.0
    %436 = vmatpush1.msra.mxu0 0.0
    %437 = vmatprep.subr.mxu0 0.0
    %438 = vmatpush1.msra.mxu0 0.0
    %439 = vmatprep.subr.mxu0 0.0
    %440 = vmatpush1.msra.mxu0 0.0
    %441 = vmatprep.subr.mxu0 0.0
    %442 = vmatpush1.msra.mxu0 0.0
    %443 = vmatprep.subr.mxu0 0.0
    %444 = vmatpush1.msra.mxu0 0.0
    %445 = vmatprep.subr.mxu0 0.0
    %446 = vmatpush1.msra.mxu0 0.0
    %447 = vmatprep.subr.mxu0 0.0
    %448 = vmatpush1.msra.mxu0 0.0
    %449 = vmatprep.subr.mxu0 0.0
    %450 = vmatpush1.msra.mxu0 0.0
    %451 = vmatprep.subr.mxu0 0.0
    %452 = vmatpush1.msra.mxu0 0.0
    %453 = vmatprep.subr.mxu0 0.0
    %454 = vmatpush1.msra.mxu0 0.0
    %455 = vmatprep.subr.mxu0 0.0
    %456 = vmatpush1.msra.mxu0 0.0
    %457 = vmatprep.subr.mxu0 0.0
    %458 = vmatpush1.msra.mxu0 0.0
    %459 = vmatprep.subr.mxu0 0.0
    %460 = vmatpush1.msra.mxu0 %v421
    %461 = vmatprep.subr.mxu0 0.0
    %462 = vmatpush1.msra.mxu0 %v420
    %463 = vmatprep.subr.mxu0 0.0
    %464 = vmatpush2.msra.mxu0 0.0
    %465 = vmatprep.subr.mxu0 0.0
    %466 = vmatpush2.msra.mxu0 0.0
    %467 = vmatprep.subr.mxu0 0.0
    %468 = vmatpush2.msra.mxu0 0.0
    %469 = vmatprep.subr.mxu0 0.0
    %470 = vmatpush2.msra.mxu0 0.0
    %471 = vmatprep.subr.mxu0 0.0
    %472 = vmatpush2.msra.mxu0 0.0
    %473 = vmatprep.subr.mxu0 0.0
    %474 = vmatpush2.msra.mxu0 0.0
    %475 = vmatprep.subr.mxu0 0.0
    %476 = vmatpush2.msra.mxu0 0.0
    %477 = vmatprep.subr.mxu0 0.0
    %478 = vmatpush2.msra.mxu0 0.0
    %479 = vmatprep.subr.mxu0 0.0
    %480 = vmatpush2.msra.mxu0 0.0
    %481 = vmatprep.subr.mxu0 0.0
    %482 = vmatpush2.msra.mxu0 0.0
    %483 = vmatprep.subr.mxu0 0.0
    %484 = vmatpush2.msra.mxu0 0.0
    %485 = vmatprep.subr.mxu0 0.0
    %486 = vmatpush2.msra.mxu0 0.0
    %487 = vmatprep.subr.mxu0 0.0
    %488 = vmatpush2.msra.mxu0 0.0
    %489 = vmatprep.subr.mxu0 0.0
    %490 = vmatpush2.msra.mxu0 0.0
    %491 = vmatprep.subr.mxu0 0.0
    %492 = vmatpush2.msra.mxu0 0.0
    %493 = vmatprep.subr.mxu0 0.0
    %494 = vmatpush2.msra.mxu0 0.0
    %495 = vmatprep.mubr.f32.mxu0 0.0
    %496 = vmatmul.mubr.f32.gmra.mxu0 %v429
    %v497 = vpop.f32.mrf.mxu0
    %v498 = vadd.f32 0.0, %v497
    %v499 = vpop.f32.mrf.mxu0
    %500 = vdwg.mxu0
    %501 = vrot.lane.b32.xlu0 %v46, 64
    %v502 = vpop.permute.xlu0 %501
    %v503 = vsel %vm127, %v502, 0
    %505 = vmatprep.subr.mxu0 0.0
    %506 = vmatpush1.msra.mxu0 0.0
    %507 = vmatprep.subr.mxu0 0.0
    %508 = vmatpush1.msra.mxu0 0.0
    %509 = vmatprep.subr.mxu0 0.0
    %510 = vmatpush1.msra.mxu0 0.0
    %511 = vmatprep.subr.mxu0 0.0
    %512 = vmatpush1.msra.mxu0 0.0
    %513 = vmatprep.subr.mxu0 0.0
    %514 = vmatpush1.msra.mxu0 0.0
    %515 = vmatprep.subr.mxu0 0.0
    %516 = vmatpush1.msra.mxu0 0.0
    %517 = vmatprep.subr.mxu0 0.0
    %518 = vmatpush1.msra.mxu0 0.0
    %519 = vmatprep.subr.mxu0 0.0
    %520 = vmatpush1.msra.mxu0 0.0
    %521 = vmatprep.subr.mxu0 0.0
    %522 = vmatpush1.msra.mxu0 0.0
    %523 = vmatprep.subr.mxu0 0.0
    %524 = vmatpush1.msra.mxu0 0.0
    %525 = vmatprep.subr.mxu0 0.0
    %526 = vmatpush1.msra.mxu0 0.0
    %527 = vmatprep.subr.mxu0 0.0
    %528 = vmatpush1.msra.mxu0 0.0
    %529 = vmatprep.subr.mxu0 0.0
    %530 = vmatpush1.msra.mxu0 %v426
    %531 = vmatprep.subr.mxu0 0.0
    %532 = vmatpush1.msra.mxu0 %v425
    %533 = vmatprep.subr.mxu0 0.0
    %534 = vmatpush1.msra.mxu0 %v424
    %535 = vmatprep.subr.mxu0 0.0
    %536 = vmatpush1.msra.mxu0 %v423
    %537 = vmatprep.subr.mxu0 0.0
    %538 = vmatpush2.msra.mxu0 0.0
    %539 = vmatprep.subr.mxu0 0.0
    %540 = vmatpush2.msra.mxu0 0.0
    %541 = vmatprep.subr.mxu0 0.0
    %542 = vmatpush2.msra.mxu0 0.0
    %543 = vmatprep.subr.mxu0 0.0
    %544 = vmatpush2.msra.mxu0 0.0
    %545 = vmatprep.subr.mxu0 0.0
    %546 = vmatpush2.msra.mxu0 0.0
    %547 = vmatprep.subr.mxu0 0.0
    %548 = vmatpush2.msra.mxu0 0.0
    %549 = vmatprep.subr.mxu0 0.0
    %550 = vmatpush2.msra.mxu0 0.0
    %551 = vmatprep.subr.mxu0 0.0
    %552 = vmatpush2.msra.mxu0 0.0
    %553 = vmatprep.subr.mxu0 0.0
    %554 = vmatpush2.msra.mxu0 0.0
    %555 = vmatprep.subr.mxu0 0.0
    %556 = vmatpush2.msra.mxu0 0.0
    %557 = vmatprep.subr.mxu0 0.0
    %558 = vmatpush2.msra.mxu0 0.0
    %559 = vmatprep.subr.mxu0 0.0
    %560 = vmatpush2.msra.mxu0 0.0
    %561 = vmatprep.subr.mxu0 0.0
    %562 = vmatpush2.msra.mxu0 0.0
    %563 = vmatprep.subr.mxu0 0.0
    %564 = vmatpush2.msra.mxu0 0.0
    %565 = vmatprep.subr.mxu0 0.0
    %566 = vmatpush2.msra.mxu0 0.0
    %567 = vmatprep.subr.mxu0 0.0
    %568 = vmatpush2.msra.mxu0 0.0
    %569 = vmatprep.mubr.f32.mxu0 0.0
    %570 = vmatmul.mubr.f32.gmra.mxu0 %v503
    %v571 = vpop.f32.mrf.mxu0
    %v572 = vadd.f32 0.0, %v571
    %v573 = vpop.f32.mrf.mxu0
    %574 = vdwg.mxu0
    %v575 = vadd.f32 %v498, %v572
    %v576 = vxor.u32 %v575, 2147483648
    %v577 = vmul.f32 %v576, 1.442695
    %v578 = vpow.pop %v577
    %v579 = vadd.f32 %v578, 1.0
    %v580 = vrcp.pop %v579
    %v581 = vmul.f32 1.0, %v580
    %583 = vrot.lane.b32.xlu0 %v572, 64
    %v584 = vpop.permute.xlu0 %583
    %v586 = vmul.f32 %v581, %v584
    %588 = vrot.lane.b32.xlu0 %v586, 64
    %v589 = vpop.permute.xlu0 %588
    %v591 = vadd.f32 %v498, %v589
    %v592 = vtanh.pop %v591
    %v593 = vsub.f32 %v46, %v592
    %595 = vrot.lane.b32.xlu0 %v593, 96
    %v596 = vpop.permute.xlu0 %595
    %v598 = vmul.f32 %v581, %v596
    %600 = vrot.lane.b32.xlu0 %v598, 32
    %v601 = vpop.permute.xlu0 %600
    %v603 = vadd.f32 %v592, %v601
    %s604 = scalar_lea.vmem [#allocation2], 48
    %v605 = vld [vmem:[%s604] sm:$0xff]
    %v606 = vld [vmem:[%s604 + $0x8] sm:$0xff]
    %s607 = scalar_lea.vmem [#allocation4], 96
    %v608 = vld [vmem:[%s607] sm:$0xff]
    %v609 = vld [vmem:[%s607 + $0x8] sm:$0xff]
    %v610 = vld [vmem:[%s607 + $0x10] sm:$0xff]
    %v611 = vld [vmem:[%s607 + $0x18] sm:$0xff]
    %612 = vrot.lane.b32.xlu0 %v45, 80
    %v613 = vpop.permute.xlu0 %612
    %v614 = vsel %vm53, %v613, 0
    %616 = vmatprep.subr.mxu0 0.0
    %617 = vmatpush1.msra.mxu0 0.0
    %618 = vmatprep.subr.mxu0 0.0
    %619 = vmatpush1.msra.mxu0 0.0
    %620 = vmatprep.subr.mxu0 0.0
    %621 = vmatpush1.msra.mxu0 0.0
    %622 = vmatprep.subr.mxu0 0.0
    %623 = vmatpush1.msra.mxu0 0.0
    %624 = vmatprep.subr.mxu0 0.0
    %625 = vmatpush1.msra.mxu0 0.0
    %626 = vmatprep.subr.mxu0 0.0
    %627 = vmatpush1.msra.mxu0 0.0
    %628 = vmatprep.subr.mxu0 0.0
    %629 = vmatpush1.msra.mxu0 0.0
    %630 = vmatprep.subr.mxu0 0.0
    %631 = vmatpush1.msra.mxu0 0.0
    %632 = vmatprep.subr.mxu0 0.0
    %633 = vmatpush1.msra.mxu0 0.0
    %634 = vmatprep.subr.mxu0 0.0
    %635 = vmatpush1.msra.mxu0 0.0
    %636 = vmatprep.subr.mxu0 0.0
    %637 = vmatpush1.msra.mxu0 0.0
    %638 = vmatprep.subr.mxu0 0.0
    %639 = vmatpush1.msra.mxu0 0.0
    %640 = vmatprep.subr.mxu0 0.0
    %641 = vmatpush1.msra.mxu0 0.0
    %642 = vmatprep.subr.mxu0 0.0
    %643 = vmatpush1.msra.mxu0 0.0
    %644 = vmatprep.subr.mxu0 0.0
    %645 = vmatpush1.msra.mxu0 %v606
    %646 = vmatprep.subr.mxu0 0.0
    %647 = vmatpush1.msra.mxu0 %v605
    %648 = vmatprep.subr.mxu0 0.0
    %649 = vmatpush2.msra.mxu0 0.0
    %650 = vmatprep.subr.mxu0 0.0
    %651 = vmatpush2.msra.mxu0 0.0
    %652 = vmatprep.subr.mxu0 0.0
    %653 = vmatpush2.msra.mxu0 0.0
    %654 = vmatprep.subr.mxu0 0.0
    %655 = vmatpush2.msra.mxu0 0.0
    %656 = vmatprep.subr.mxu0 0.0
    %657 = vmatpush2.msra.mxu0 0.0
    %658 = vmatprep.subr.mxu0 0.0
    %659 = vmatpush2.msra.mxu0 0.0
    %660 = vmatprep.subr.mxu0 0.0
    %661 = vmatpush2.msra.mxu0 0.0
    %662 = vmatprep.subr.mxu0 0.0
    %663 = vmatpush2.msra.mxu0 0.0
    %664 = vmatprep.subr.mxu0 0.0
    %665 = vmatpush2.msra.mxu0 0.0
    %666 = vmatprep.subr.mxu0 0.0
    %667 = vmatpush2.msra.mxu0 0.0
    %668 = vmatprep.subr.mxu0 0.0
    %669 = vmatpush2.msra.mxu0 0.0
    %670 = vmatprep.subr.mxu0 0.0
    %671 = vmatpush2.msra.mxu0 0.0
    %672 = vmatprep.subr.mxu0 0.0
    %673 = vmatpush2.msra.mxu0 0.0
    %674 = vmatprep.subr.mxu0 0.0
    %675 = vmatpush2.msra.mxu0 0.0
    %676 = vmatprep.subr.mxu0 0.0
    %677 = vmatpush2.msra.mxu0 0.0
    %678 = vmatprep.subr.mxu0 0.0
    %679 = vmatpush2.msra.mxu0 0.0
    %680 = vmatprep.mubr.f32.mxu0 0.0
    %681 = vmatmul.mubr.f32.gmra.mxu0 %v614
    %v682 = vpop.f32.mrf.mxu0
    %v683 = vadd.f32 0.0, %v682
    %v684 = vpop.f32.mrf.mxu0
    %685 = vdwg.mxu0
    %686 = vrot.lane.b32.xlu0 %v46, 32
    %v687 = vpop.permute.xlu0 %686
    %v688 = vsel %vm127, %v687, 0
    %690 = vmatprep.subr.mxu0 0.0
    %691 = vmatpush1.msra.mxu0 0.0
    %692 = vmatprep.subr.mxu0 0.0
    %693 = vmatpush1.msra.mxu0 0.0
    %694 = vmatprep.subr.mxu0 0.0
    %695 = vmatpush1.msra.mxu0 0.0
    %696 = vmatprep.subr.mxu0 0.0
    %697 = vmatpush1.msra.mxu0 0.0
    %698 = vmatprep.subr.mxu0 0.0
    %699 = vmatpush1.msra.mxu0 0.0
    %700 = vmatprep.subr.mxu0 0.0
    %701 = vmatpush1.msra.mxu0 0.0
    %702 = vmatprep.subr.mxu0 0.0
    %703 = vmatpush1.msra.mxu0 0.0
    %704 = vmatprep.subr.mxu0 0.0
    %705 = vmatpush1.msra.mxu0 0.0
    %706 = vmatprep.subr.mxu0 0.0
    %707 = vmatpush1.msra.mxu0 0.0
    %708 = vmatprep.subr.mxu0 0.0
    %709 = vmatpush1.msra.mxu0 0.0
    %710 = vmatprep.subr.mxu0 0.0
    %711 = vmatpush1.msra.mxu0 0.0
    %712 = vmatprep.subr.mxu0 0.0
    %713 = vmatpush1.msra.mxu0 0.0
    %714 = vmatprep.subr.mxu0 0.0
    %715 = vmatpush1.msra.mxu0 %v611
    %716 = vmatprep.subr.mxu0 0.0
    %717 = vmatpush1.msra.mxu0 %v610
    %718 = vmatprep.subr.mxu0 0.0
    %719 = vmatpush1.msra.mxu0 %v609
    %720 = vmatprep.subr.mxu0 0.0
    %721 = vmatpush1.msra.mxu0 %v608
    %722 = vmatprep.subr.mxu0 0.0
    %723 = vmatpush2.msra.mxu0 0.0
    %724 = vmatprep.subr.mxu0 0.0
    %725 = vmatpush2.msra.mxu0 0.0
    %726 = vmatprep.subr.mxu0 0.0
    %727 = vmatpush2.msra.mxu0 0.0
    %728 = vmatprep.subr.mxu0 0.0
    %729 = vmatpush2.msra.mxu0 0.0
    %730 = vmatprep.subr.mxu0 0.0
    %731 = vmatpush2.msra.mxu0 0.0
    %732 = vmatprep.subr.mxu0 0.0
    %733 = vmatpush2.msra.mxu0 0.0
    %734 = vmatprep.subr.mxu0 0.0
    %735 = vmatpush2.msra.mxu0 0.0
    %736 = vmatprep.subr.mxu0 0.0
    %737 = vmatpush2.msra.mxu0 0.0
    %738 = vmatprep.subr.mxu0 0.0
    %739 = vmatpush2.msra.mxu0 0.0
    %740 = vmatprep.subr.mxu0 0.0
    %741 = vmatpush2.msra.mxu0 0.0
    %742 = vmatprep.subr.mxu0 0.0
    %743 = vmatpush2.msra.mxu0 0.0
    %744 = vmatprep.subr.mxu0 0.0
    %745 = vmatpush2.msra.mxu0 0.0
    %746 = vmatprep.subr.mxu0 0.0
    %747 = vmatpush2.msra.mxu0 0.0
    %748 = vmatprep.subr.mxu0 0.0
    %749 = vmatpush2.msra.mxu0 0.0
    %750 = vmatprep.subr.mxu0 0.0
    %751 = vmatpush2.msra.mxu0 0.0
    %752 = vmatprep.subr.mxu0 0.0
    %753 = vmatpush2.msra.mxu0 0.0
    %754 = vmatprep.mubr.f32.mxu0 0.0
    %755 = vmatmul.mubr.f32.gmra.mxu0 %v688
    %v756 = vpop.f32.mrf.mxu0
    %v757 = vadd.f32 0.0, %v756
    %v758 = vpop.f32.mrf.mxu0
    %759 = vdwg.mxu0
    %v760 = vadd.f32 %v683, %v757
    %v761 = vxor.u32 %v760, 2147483648
    %v762 = vmul.f32 %v761, 1.442695
    %v763 = vpow.pop %v762
    %v764 = vadd.f32 %v763, 1.0
    %v765 = vrcp.pop %v764
    %v766 = vmul.f32 1.0, %v765
    %768 = vrot.lane.b32.xlu0 %v757, 64
    %v769 = vpop.permute.xlu0 %768
    %v771 = vmul.f32 %v766, %v769
    %773 = vrot.lane.b32.xlu0 %v771, 64
    %v774 = vpop.permute.xlu0 %773
    %v776 = vadd.f32 %v683, %v774
    %v777 = vtanh.pop %v776
    %779 = vrot.lane.b32.xlu0 %v777, 32
    %v780 = vpop.permute.xlu0 %779
    %v782 = vsub.f32 %v46, %v780
    %784 = vrot.lane.b32.xlu0 %v782, 64
    %v785 = vpop.permute.xlu0 %784
    %v787 = vmul.f32 %v766, %v785
    %789 = vrot.lane.b32.xlu0 %v787, 32
    %v790 = vpop.permute.xlu0 %789
    %v792 = vadd.f32 %v777, %v790
    %794 = vrot.lane.b32.xlu0 %v233, 64
    %v795 = vpop.permute.xlu0 %794
    %798 = vrot.lane.b32.xlu0 %v418, 96
    %v799 = vpop.permute.xlu0 %798
    %802 = vrot.lane.b32.xlu0 %v792, 32
    %v803 = vpop.permute.xlu0 %802
    %v805 = vsel %vm127, %v795, %v799
    %vm806 = vcmask 523264
    %v807 = vsel %vm806, %v805, %v603
    %vm808 = vcmask 785408
    %v809 = vsel %vm808, %v807, %v803
    %810 = vst [vmem:[%s4] sm:$0x3] %v809
    // Predicated region
    $region26: #{group_gru_cell.1} parent=1 // pred_check
      _
    $region27: #{group_gru_cell.1} parent=1 // pred_check_branch
      %812 = sbr.rel (0) target = $region29
    $region28: #{group_gru_cell.1} parent=1 // pred_region
      _
    $region29: #{group_gru_cell.1} parent=1 // pred_fallthru
      _
    // Predicated region
    $region30: #{group_gru_cell.1} parent=1 // pred_check
      _
    $region31: #{group_gru_cell.1} parent=1 // pred_check_branch
      %814 = sbr.rel (0) target = $region33
    $region32: #{group_gru_cell.1} parent=1 // pred_region
      _
    $region33: #{group_gru_cell.1} parent=1 // pred_fallthru
      _
    %815 = vsyncpa [#allocation3], 1
    %816 = vsyncpa [#allocation5], 1

</llo_original>
